<compile_context>
chip_gen: v7x
topology: tpu7x:2x2x1
jax: 0.10.0
libtpu: 0.0.40
codegen_flags: <defaults>
</compile_context>

<pallas_src>
import functools

import jax
import jax.numpy as jnp
from jax.experimental import pallas as pl
from jax.experimental.pallas import tpu as pltpu


def _round_up(n, m):
    return ((n + m - 1) // m) * m


def _layernorm_kernel(x_ref, a_ref, b_ref, o_ref, *, eps, features):
    x = x_ref[...].astype(jnp.float32)                         # (tile_rows, F)
    mean = jnp.mean(x, axis=-1, keepdims=True)                  # (tile_rows, 1)
    centered = x - mean
    # PyTorch std default is unbiased (ddof=1): sum(centered^2) / (N - 1)
    inv_n = 1.0 / float(max(features - 1, 1))
    var = jnp.sum(centered * centered, axis=-1, keepdims=True) * inv_n
    denom = jnp.sqrt(var) + eps                                 # (tile_rows, 1)
    # EUP approx reciprocal on the per-row scalar column + two Newton steps
    # (~f32-exact); the full-tile divide becomes a cheap broadcast multiply.
    inv = pl.reciprocal(denom, approx=True)
    inv = inv * (2.0 - denom * inv)
    inv = inv * (2.0 - denom * inv)
    a = a_ref[...]                                              # (1, F), f32
    b = b_ref[...]                                              # (1, F), f32
    # `centered` feeds the output directly: no separate normalized full-tile
    # temp is materialized before the store.
    o_ref[...] = (a * (centered * inv) + b).astype(o_ref.dtype)


def _gen_params():
    """Per-generation knobs.

    Returns (per_step_traffic_target_bytes, inflight_vmem_cap_bytes,
             phys_vmem_bytes, num_tensorcores).
    """
    phys_vmem = 64 << 20  # conservative (v7x-sized) fallback
    try:
        phys_vmem = int(pltpu.get_tpu_info().vmem_capacity_bytes)
    except Exception:
        pass
    kind = ""
    try:
        kind = jax.devices()[0].device_kind.lower()
    except Exception:
        pass
    if phys_vmem <= (64 << 20) or "v7" in kind:
        # v7x: 64 MiB VMEM/TC, ~3.2 TB/s HBM/TC, 2 TensorCores share the grid.
        return 20 << 20, 40 << 20, phys_vmem, 2
    if "v5" in kind:
        # v5e: 128 MiB VMEM, ~0.8 TB/s HBM, 1 TensorCore.
        return 6 << 20, 32 << 20, phys_vmem, 1
    # v6e (default for 128 MiB parts): ~1.4 TB/s HBM, 1 TensorCore.
    return 12 << 20, 48 << 20, phys_vmem, 1


def _pick_tile_rows(rows, features, itemsize, traffic_target, vmem_cap, num_tc):
    # sublane packing: second-to-last block dim must be a multiple of the
    # packed sublane count (8 for f32, 16 for bf16, 32 for int8/fp8).
    sublane = {4: 8, 2: 16, 1: 32}.get(itemsize, 8)
    io_per_row = 2 * features * itemsize                 # HBM read + write
    # double-buffered input + output in x dtype, plus f32 working temps
    # (x_f32 + centered).
    vmem_per_row = features * (4 * itemsize + 8)

    t_traffic = traffic_target // max(io_per_row, 1)
    t_vmem = vmem_cap // max(vmem_per_row, 1)
    tile_rows = max(sublane, min(t_traffic, t_vmem) // sublane * sublane)

    rows_padded = _round_up(rows, sublane)
    tile_rows = min(tile_rows, rows_padded)

    if num_tc >= 2 and rows > sublane:
        # Megacore (v7x): prefer an even step count (ideally >= 8) so both
        # TensorCores get equal work — but never shrink the per-step traffic
        # below ~1/4 of the target, and never above the VMEM-derived max.
        min_rows_per_step = max(
            sublane,
            ((traffic_target // 4) // max(io_per_row, 1)) // sublane * sublane,
        )
        for steps in (8, 6, 4, 2):
            cand = _round_up(pl.cdiv(rows, steps), sublane)
            cand = min(cand, tile_rows)
            if cand >= min_rows_per_step and pl.cdiv(rows, cand) % 2 == 0:
                return cand, sublane
        # rows too small to split evenly without collapsing traffic: keep the
        # big tile (single/odd-step grid; imbalance is bounded by one tiny tile).
    return tile_rows, sublane


def layer_norm(x, a_2, b_2, eps=1e-6, tile_rows=None):
    """LayerNorm over the last axis of x, matching the PyTorch module."""
    orig_shape = x.shape
    features = int(orig_shape[-1])
    rows = 1
    for d in orig_shape[:-1]:
        rows *= int(d)
    x2d = x.reshape(rows, features)

    itemsize = jnp.dtype(x.dtype).itemsize
    traffic_target, vmem_cap, phys_vmem, num_tc = _gen_params()

    if tile_rows is None:
        tile_rows, sublane = _pick_tile_rows(
            rows, features, itemsize, traffic_target, vmem_cap, num_tc)
    else:
        sublane = {4: 8, 2: 16, 1: 32}.get(itemsize, 8)
        vmem_per_row = features * (4 * itemsize + 8)
        t_vmem = max(sublane, (vmem_cap // max(vmem_per_row, 1)) // sublane * sublane)
        tile_rows = max(sublane, _round_up(int(tile_rows), sublane))
        # clamp to the VMEM-derived maximum so the same call site is portable
        # across generations (v6e 128 MiB vs v7x 64 MiB per TC).
        tile_rows = min(tile_rows, t_vmem, _round_up(rows, sublane))

    # gamma/beta: cast to f32 once here so the kernel's per-step use is free.
    a2d = a_2.astype(jnp.float32).reshape(1, features)
    b2d = b_2.astype(jnp.float32).reshape(1, features)

    # No jnp.pad: let the grid be ragged; Pallas masks the partial last block's
    # writeback and each row is computed independently, so tail garbage rows
    # never contaminate valid output rows.
    grid = (pl.cdiv(rows, tile_rows),)

    # vmem_limit: exactly what the pipeline needs (double-buffered in + out
    # tiles, f32 temps, double-buffered gamma/beta) plus headroom for Mosaic
    # internal scratch — never the physical ceiling.
    needed = (4 * tile_rows * features * itemsize      # dbl-buffered in + out
              + 8 * tile_rows * features               # f32 working temps
              + 16 * features                          # dbl-buffered gamma/beta
              + (4 << 20))                             # headroom
    vmem_limit = max(16 << 20, min(_round_up(needed, 1 << 20), phys_vmem))

    out2d = pl.pallas_call(
        functools.partial(_layernorm_kernel, eps=eps, features=features),
        out_shape=jax.ShapeDtypeStruct((rows, features), x.dtype),
        grid_spec=pltpu.PrefetchScalarGridSpec(
            num_scalar_prefetch=0,
            grid=grid,
            in_specs=[
                pl.BlockSpec((tile_rows, features), lambda i: (i, 0)),
                pl.BlockSpec((1, features), lambda i: (0, 0)),
                pl.BlockSpec((1, features), lambda i: (0, 0)),
            ],
            out_specs=pl.BlockSpec((tile_rows, features), lambda i: (i, 0)),
        ),
        compiler_params=pltpu.CompilerParams(
            dimension_semantics=("parallel",),
            vmem_limit_bytes=vmem_limit,
        ),
    )(x2d, a2d, b2d)

    return out2d.reshape(orig_shape)


if __name__ == "__main__":
    key = jax.random.PRNGKey(0)
    batch, seq, hidden = 2, 8, 32

    x = jax.random.normal(key, (batch, seq, hidden), dtype=jnp.float32)

    # deterministic params, same init as the PyTorch module:
    # a_2 = ones(features), b_2 = zeros(features)
    a_2 = jnp.ones((hidden,), dtype=jnp.float32)
    b_2 = jnp.zeros((hidden,), dtype=jnp.float32)

    out = layer_norm(x, a_2, b_2, eps=1e-6)
    out = jax.block_until_ready(out)

    # reference check (pure JAX, mirrors PyTorch semantics with unbiased std)
    mean = jnp.mean(x, axis=-1, keepdims=True)
    var = jnp.sum((x - mean) ** 2, axis=-1, keepdims=True) / (hidden - 1)
    ref = a_2 * (x - mean) / (jnp.sqrt(var) + 1e-6) + b_2
    assert jnp.allclose(out, ref, atol=1e-5, rtol=1e-5), "mismatch vs reference"

    print("KERNEL_OK")
</pallas_src>

<mosaic_0001>
module attributes {stable_mosaic.version = 11 : i64} {
  func.func @_layernorm_kernel(%arg0: i32, %arg1: memref<16x32xf32, #tpu.memory_space<vmem>>, %arg2: memref<1x32xf32, #tpu.memory_space<vmem>>, %arg3: memref<1x32xf32, #tpu.memory_space<vmem>>, %arg4: memref<16x32xf32, #tpu.memory_space<vmem>>) attributes {dimension_semantics = [#tpu.dimension_semantics<parallel>], iteration_bounds = array<i64: 1>, scalar_prefetch = 0 : i64, scratch_operands = 0 : i64, tpu.core_type = #tpu.core_type<tc>, window_params = [{transform_indices = @transform_0, window_bounds = array<i64: 16, 32>}, {pipeline_mode = #tpu.pipeline_mode<synchronous>, transform_indices = @transform_1, window_bounds = array<i64: 1, 32>}, {pipeline_mode = #tpu.pipeline_mode<synchronous>, transform_indices = @transform_2, window_bounds = array<i64: 1, 32>}, {transform_indices = @transform_3, window_bounds = array<i64: 16, 32>}]} {
    %c0 = arith.constant 0 : index
    %c0_0 = arith.constant 0 : index
    %0 = vector.load %arg1[%c0, %c0_0] : memref<16x32xf32, #tpu.memory_space<vmem>>, vector<16x32xf32>
    %cst = arith.constant dense<0.000000e+00> : vector<16xf32>
    %1 = vector.multi_reduction <add>, %0, %cst [1] : vector<16x32xf32> to vector<16xf32>
    %2 = vector.shape_cast %1 : vector<16xf32> to vector<16x1xf32>
    %cst_1 = arith.constant 3.200000e+01 : f32
    %3 = vector.broadcast %cst_1 : f32 to vector<16x1xf32>
    %4 = arith.divf %2, %3 : vector<16x1xf32>
    %5 = vector.broadcast %4 : vector<16x1xf32> to vector<16x32xf32>
    %6 = arith.subf %0, %5 : vector<16x32xf32>
    %7 = arith.mulf %6, %6 : vector<16x32xf32>
    %cst_2 = arith.constant dense<0.000000e+00> : vector<16xf32>
    %8 = vector.multi_reduction <add>, %7, %cst_2 [1] : vector<16x32xf32> to vector<16xf32>
    %9 = vector.shape_cast %8 : vector<16xf32> to vector<16x1xf32>
    %cst_3 = arith.constant 0.0322580636 : f32
    %10 = vector.broadcast %cst_3 : f32 to vector<16x1xf32>
    %11 = arith.mulf %9, %10 : vector<16x1xf32>
    %12 = math.sqrt %11 : vector<16x1xf32>
    %cst_4 = arith.constant 9.99999997E-7 : f32
    %13 = vector.broadcast %cst_4 : f32 to vector<16x1xf32>
    %14 = arith.addf %12, %13 : vector<16x1xf32>
    %15 = tpu.reciprocal %14 {approx = true} : vector<16x1xf32> -> vector<16x1xf32>
    %16 = arith.mulf %14, %15 : vector<16x1xf32>
    %cst_5 = arith.constant 2.000000e+00 : f32
    %17 = vector.broadcast %cst_5 : f32 to vector<16x1xf32>
    %18 = arith.subf %17, %16 : vector<16x1xf32>
    %19 = arith.mulf %15, %18 : vector<16x1xf32>
    %20 = arith.mulf %14, %19 : vector<16x1xf32>
    %cst_6 = arith.constant 2.000000e+00 : f32
    %21 = vector.broadcast %cst_6 : f32 to vector<16x1xf32>
    %22 = arith.subf %21, %20 : vector<16x1xf32>
    %23 = arith.mulf %19, %22 : vector<16x1xf32>
    %c0_7 = arith.constant 0 : index
    %c0_8 = arith.constant 0 : index
    %24 = vector.load %arg2[%c0_7, %c0_8] : memref<1x32xf32, #tpu.memory_space<vmem>>, vector<1x32xf32>
    %c0_9 = arith.constant 0 : index
    %c0_10 = arith.constant 0 : index
    %25 = vector.load %arg3[%c0_9, %c0_10] : memref<1x32xf32, #tpu.memory_space<vmem>>, vector<1x32xf32>
    %26 = vector.broadcast %23 : vector<16x1xf32> to vector<16x32xf32>
    %27 = arith.mulf %6, %26 : vector<16x32xf32>
    %28 = vector.broadcast %24 : vector<1x32xf32> to vector<16x32xf32>
    %29 = arith.mulf %28, %27 : vector<16x32xf32>
    %30 = vector.broadcast %25 : vector<1x32xf32> to vector<16x32xf32>
    %31 = arith.addf %29, %30 : vector<16x32xf32>
    %c0_11 = arith.constant 0 : index
    %c0_12 = arith.constant 0 : index
    %32 = vector.load %arg4[%c0_11, %c0_12] : memref<16x32xf32, #tpu.memory_space<vmem>>, vector<16x32xf32>
    tpu.vector_store %arg4[%c0_11, %c0_12], %31 {strides = array<i32>} : memref<16x32xf32, #tpu.memory_space<vmem>>, vector<16x32xf32>,
    return
  }
  func.func @transform_0(%arg0: i32) -> (i32, i32) {
    %c0_i32 = arith.constant 0 : i32
    %c0_i32_0 = arith.constant 0 : i32
    return %arg0, %c0_i32 : i32, i32
  }
  func.func @transform_1(%arg0: i32) -> (i32, i32) {
    %c0_i32 = arith.constant 0 : i32
    %c0_i32_0 = arith.constant 0 : i32
    %c0_i32_1 = arith.constant 0 : i32
    return %c0_i32, %c0_i32_0 : i32, i32
  }
  func.func @transform_2(%arg0: i32) -> (i32, i32) {
    %c0_i32 = arith.constant 0 : i32
    %c0_i32_0 = arith.constant 0 : i32
    %c0_i32_1 = arith.constant 0 : i32
    return %c0_i32, %c0_i32_0 : i32, i32
  }
  func.func @transform_3(%arg0: i32) -> (i32, i32) {
    %c0_i32 = arith.constant 0 : i32
    %c0_i32_0 = arith.constant 0 : i32
    return %arg0, %c0_i32 : i32, i32
  }
}

</mosaic_0001>

<llo_original>
// kernel: tpu_custom_call.1
$region0: #{tpu_custom_call.1}
  #allocation0 [shape = 'u32[]', space=smem, size = 0x4, offset = 0x4, fixed_abs, tag = 'smem constant byte address 0x4 - core index']
  #allocation1 [shape = 'u32[144,128]{1,0:T(1,128)}', space=vmem, size = 0x12000, scoped, tag = 'internal scratch']
  %s0 = inlined_call_operand.hbm [shape: f32[16,32], index: 0, kind: input, shape index: {}]
  %s1 = inlined_call_operand.vmem [shape: f32[1,32], index: 1, kind: input, shape index: {}]
  %s2 = inlined_call_operand.vmem [shape: f32[1,32], index: 2, kind: input, shape index: {}]
  %s3 = inlined_call_operand.hbm [shape: f32[16,32], index: 3, kind: output, shape index: {}]
  %s4 = sld [smem:[#allocation0]]
  $region26: #{tpu_custom_call.1} parent=0
    _
  %s6 = ssub.s32 1, %s4
  %s7 = scalar_select 0, %s6, %s4
  $region1: #{tpu_custom_call.1} parent=0
    #allocation2 [shape = 'u8[8192]{0}', space=vmem, size = 0x2000, scoped, tag = 'input window, operand 0, single buffered']
    #allocation3 [shape = 's32[1]{0}', space=sflag, size = 0x4, scoped, tag = 'scoped memory for tpu_custom_call.1']
    #allocation4 [shape = 's32[1]{0}', space=sflag, size = 0x4, scoped, tag = 'scoped memory for tpu_custom_call.1']
    #allocation5 [shape = 'u8[8192]{0}', space=vmem, size = 0x2000, scoped, tag = 'output window, operand 0, single buffered']
    %8 = vsyncpa [#allocation3], 0
    %9 = vsyncpa [#allocation4], 0
    // Predicated region
    $region2: #{tpu_custom_call.1} parent=1 // pred_check
      _
    $region3: #{tpu_custom_call.1} parent=1 // pred_check_branch
      %11 = sbr.rel (0) target = $region5
    $region4: #{tpu_custom_call.1} parent=1 // pred_region
      %s13 = ssub.s32 256, 256
      %14 = vsyncadd [#allocation3], %s13
      %s15 = sshll.u32 [#allocation2], 4
      %s16 = int_to_ptr.vmem [resolvable:$true] %s15
      %21 = dma.hbm_to_vmem [thread:$0]  %s0, 256, %s16, [#allocation3], 128, 128, 8
    $region5: #{tpu_custom_call.1} parent=1 // pred_fallthru
      _
    // Predicated region
    $region6: #{tpu_custom_call.1} parent=1 // pred_check
      _
    $region7: #{tpu_custom_call.1} parent=1 // pred_check_branch
      %23 = sbr.rel (0) target = $region9
    $region8: #{tpu_custom_call.1} parent=1 // pred_region
      _
    $region9: #{tpu_custom_call.1} parent=1 // pred_fallthru
      _
    // Predicated region
    $region10: #{tpu_custom_call.1} parent=1 // pred_check
      _
    $region11: #{tpu_custom_call.1} parent=1 // pred_check_branch
      %25 = sbr.rel (0) target = $region13
    $region12: #{tpu_custom_call.1} parent=1 // pred_region
      _
    $region13: #{tpu_custom_call.1} parent=1 // pred_fallthru
      _
    // Predicated region
    $region14: #{tpu_custom_call.1} parent=1 // pred_check
      _
    $region15: #{tpu_custom_call.1} parent=1 // pred_check_branch
      %27 = sbr.rel (0) target = $region17
    $region16: #{tpu_custom_call.1} parent=1 // pred_region
      %28 = dma.done [#allocation3], 256
    $region17: #{tpu_custom_call.1} parent=1 // pred_fallthru
      _
    %v29 = vld [vmem:[#allocation2] sm:$0xff]
    %v30 = vld [vmem:[#allocation2 + $0x8] sm:$0xff]
    %vm31 = vcmask 261120
    %v32 = vsel %vm31, %v29, 0.0
    %33 = vadd.xlane.f32.xlu0 %v32
    %v34 = vpop.xlane.xlu0 %33
    %v35 = vsel %vm31, %v30, 0.0
    %36 = vadd.xlane.f32.xlu0 %v35
    %v37 = vpop.xlane.xlu0 %36
    %v38 = vrcp.pop 32.0
    %v39 = vmul.f32 %v34, %v38
    %v40 = vmul.f32 %v37, %v38
    %v41 = vsub.f32 %v29, %v39
    %v42 = vsub.f32 %v30, %v40
    %v43 = vmul.f32 %v41, %v41
    %v44 = vmul.f32 %v42, %v42
    %v45 = vsel %vm31, %v43, 0.0
    %46 = vadd.xlane.f32.xlu0 %v45
    %v47 = vpop.xlane.xlu0 %46
    %v48 = vsel %vm31, %v44, 0.0
    %49 = vadd.xlane.f32.xlu0 %v48
    %v50 = vpop.xlane.xlu0 %49
    %v51 = vmul.f32 %v47, 0.032258064
    %v52 = vmul.f32 %v50, 0.032258064
    %v53 = vrsqrt.pop %v51
    %v54 = vmul.f32 %v51, %v53
    %vm55 = vcmp.eq.f32.partialorder %v51, inf
    %v56 = vsel %vm55, %v51, %v54
    %vm57 = vcmp.eq.f32.partialorder %v51, 0.0
    %v58 = vand.u32 %v51, 2147483648
    %v59 = vsel %vm57, %v58, %v56
    %v60 = vrsqrt.pop %v52
    %v61 = vmul.f32 %v52, %v60
    %vm62 = vcmp.eq.f32.partialorder %v52, inf
    %v63 = vsel %vm62, %v52, %v61
    %vm64 = vcmp.eq.f32.partialorder %v52, 0.0
    %v65 = vand.u32 %v52, 2147483648
    %v66 = vsel %vm64, %v65, %v63
    %v67 = vadd.f32 %v59, 1e-06
    %v68 = vadd.f32 %v66, 1e-06
    %v69 = vrcp.pop %v67
    %v70 = vrcp.pop %v68
    %v71 = vmul.f32 %v67, %v69
    %v72 = vmul.f32 %v68, %v70
    %v73 = vsub.f32 2.0, %v71
    %v74 = vsub.f32 2.0, %v72
    %v75 = vmul.f32 %v69, %v73
    %v76 = vmul.f32 %v70, %v74
    %v77 = vmul.f32 %v67, %v75
    %v78 = vmul.f32 %v68, %v76
    %v79 = vsub.f32 2.0, %v77
    %v80 = vsub.f32 2.0, %v78
    %v81 = vmul.f32 %v75, %v79
    %v82 = vmul.f32 %v76, %v80
    %v83 = vld [vmem:[%s1] sm:$0x1]
    %v84 = vld [vmem:[%s2] sm:$0x1]
    %v85 = vmul.f32 %v41, %v81
    %v86 = vmul.f32 %v42, %v82
    %v88 = vlaneseq
    %v89 = vshrl.u32 %v88, 7
    %v90 = vsub.s32 0, %v89
    %v91 = vrot.slane %v83, %v90
    %v93 = vmul.f32 %v91, %v85
    %v94 = vmul.f32 %v91, %v86
    %v96 = vlaneseq
    %v97 = vshrl.u32 %v96, 7
    %v98 = vsub.s32 0, %v97
    %v99 = vrot.slane %v84, %v98
    %v101 = vadd.f32 %v93, %v99
    %v102 = vadd.f32 %v94, %v99
    %103 = vst.msk [vmem:[#allocation5] sm:$0xff] %vm31, %v101
    %104 = vst.msk [vmem:[#allocation5 + $0x8] sm:$0xff] %vm31, %v102
    // Predicated region
    $region18: #{tpu_custom_call.1} parent=1 // pred_check
      _
    $region19: #{tpu_custom_call.1} parent=1 // pred_check_branch
      %106 = sbr.rel (0) target = $region21
    $region20: #{tpu_custom_call.1} parent=1 // pred_region
      %s108 = ssub.s32 256, 256
      %109 = vsyncadd [#allocation4], %s108
      %s110 = sshll.u32 [#allocation5], 4
      %s111 = int_to_ptr.vmem [resolvable:$true] %s110
      %116 = dma.vmem_to_hbm [thread:$0]  %s111, 256, %s3, [#allocation4], 128, 128, 8
    $region21: #{tpu_custom_call.1} parent=1 // pred_fallthru
      _
    // Predicated region
    $region22: #{tpu_custom_call.1} parent=1 // pred_check
      _
    $region23: #{tpu_custom_call.1} parent=1 // pred_check_branch
      %118 = sbr.rel (0) target = $region25
    $region24: #{tpu_custom_call.1} parent=1 // pred_region
      %119 = dma.done [#allocation4], 256
    $region25: #{tpu_custom_call.1} parent=1 // pred_fallthru
      _
    %120 = vsyncpa [#allocation3], 1
    %121 = vsyncpa [#allocation4], 1

</llo_original>
